<compile_context>
chip_gen: v5e
topology: v5e:2x2
jax: 0.10.0
libtpu: 0.0.40
codegen_flags: <defaults>
</compile_context>

<pallas_src>
import jax
import jax.numpy as jnp
from jax.experimental import pallas as pl
from jax.experimental.pallas import tpu as pltpu


def _leaky_relu(x, slope=0.01):
    # nn.LeakyReLU default negative_slope = 0.01
    return jnp.where(x >= 0.0, x, slope * x)


def _edge_mlp_1_kernel(src_ref, dest_ref, ea_ref,
                       w1s_ref, w1d_ref, w1e_ref, b1_ref,
                       w2_ref, b2_ref,
                       w3_ref, b3_ref,
                       o_ref):
    cdt = w1s_ref.dtype  # compute dtype for matmul operands (bf16 or f32)

    src = src_ref[...].astype(cdt)
    dest = dest_ref[...].astype(cdt)

    # --- Linear 1 (concat replaced by split-weight sum) + Dropout(0) + LeakyReLU ---
    h = (jnp.dot(src, w1s_ref[...], preferred_element_type=jnp.float32)
         + jnp.dot(dest, w1d_ref[...], preferred_element_type=jnp.float32))
    if ea_ref.shape[1] == 1:
        # K=1 contraction -> VPU broadcast multiply-add (skip a tiny-K MXU pass).
        h = h + ea_ref[...].astype(jnp.float32) * w1e_ref[...].astype(jnp.float32)
    else:
        h = h + jnp.dot(ea_ref[...].astype(cdt), w1e_ref[...],
                        preferred_element_type=jnp.float32)
    h = _leaky_relu(h + b1_ref[...])

    # --- Linear 2 + Dropout(0) + LeakyReLU ---
    h = jnp.dot(h.astype(cdt), w2_ref[...],
                preferred_element_type=jnp.float32) + b2_ref[...]
    h = _leaky_relu(h)

    # --- Linear 3 (real latent width, no lane padding) ---
    out = jnp.dot(h.astype(cdt), w3_ref[...],
                  preferred_element_type=jnp.float32) + b3_ref[...]
    o_ref[...] = out.astype(o_ref.dtype)


def _round_up(x, m):
    return ((x + m - 1) // m) * m


def edge_mlp_1_forward(src, dest, edge_attr, params, *,
                       tile_e=1024, compute_dtype=jnp.bfloat16):
    """src, dest: (E, F_node) f32; edge_attr: (E, F_edge) f32.

    params: w1 (2*F_node+F_edge, H), b1 (1, H), w2 (H, H), b2 (1, H),
            w3 (H, latent), b3 (1, latent)  -- all f32, stored (in, out).
    """
    E, f_node = src.shape
    f_edge = edge_attr.shape[1]
    H = params["w2"].shape[1]
    out_f = params["w3"].shape[1]

    # Split W1 so the concat never has to be materialized.
    w1 = params["w1"]
    w1_s = w1[:f_node]
    w1_d = w1[f_node:2 * f_node]
    w1_e = w1[2 * f_node:]

    # Matmul operands in compute_dtype (bf16 MXU-native); biases stay f32 so the
    # elementwise / accumulate path is f32.  The f_edge==1 slice stays f32 since
    # it is applied on the VPU broadcast path.
    cdt = compute_dtype
    w1_s = w1_s.astype(cdt)
    w1_d = w1_d.astype(cdt)
    w2 = params["w2"].astype(cdt)
    w3 = params["w3"].astype(cdt)
    w1_e = w1_e if f_edge == 1 else w1_e.astype(cdt)
    b1, b2, b3 = params["b1"], params["b2"], params["b3"]

    # Row tiling: multiple of 16 (bf16 sublane packing), big enough to amortize
    # the ~0.35 us per-step overhead, but capped so the grid keeps >= 2 steps
    # when E allows (v7x 2-TensorCore "parallel" split).
    tile_e = min(tile_e, _round_up(pl.cdiv(E, 2), 16))
    tile_e = max(16, _round_up(tile_e, 16))
    grid = (pl.cdiv(E, tile_e),)  # ragged last block handled by Pallas

    row_spec = lambda shape: pl.BlockSpec(shape, lambda i: (i, 0))
    fix_spec = lambda shape: pl.BlockSpec(shape, lambda i: (0, 0))

    f_in = 2 * f_node + f_edge
    wbytes = jnp.dtype(cdt).itemsize
    flops = 2 * E * (f_in * H + H * H + H * out_f)
    bytes_accessed = (4 * E * (2 * f_node + f_edge + out_f)          # activations (f32 in/out)
                      + wbytes * (2 * f_node * H + H * H + H * out_f)  # matmul weights
                      + (4 if f_edge == 1 else wbytes) * f_edge * H    # edge slice of W1
                      + 4 * (2 * H + out_f))                           # biases (f32)
    cost = pl.CostEstimate(flops=flops, transcendentals=0,
                           bytes_accessed=bytes_accessed)

    return pl.pallas_call(
        _edge_mlp_1_kernel,
        out_shape=jax.ShapeDtypeStruct((E, out_f), jnp.float32),
        grid=grid,
        in_specs=[
            row_spec((tile_e, f_node)),      # src
            row_spec((tile_e, f_node)),      # dest
            row_spec((tile_e, f_edge)),      # edge_attr
            fix_spec((f_node, H)),           # w1_src   (VMEM-resident across steps)
            fix_spec((f_node, H)),           # w1_dest
            fix_spec((f_edge, H)),           # w1_edge
            fix_spec((1, H)),                # b1
            fix_spec((H, H)),                # w2
            fix_spec((1, H)),                # b2
            fix_spec((H, out_f)),            # w3
            fix_spec((1, out_f)),            # b3
        ],
        out_specs=row_spec((tile_e, out_f)),
        compiler_params=pltpu.CompilerParams(
            dimension_semantics=("parallel",),
            vmem_limit_bytes=32 * 1024 * 1024,
        ),
        cost_estimate=cost,
    )(src, dest, edge_attr, w1_s, w1_d, w1_e, b1, w2, b2, w3, b3)


def _reference(src, dest, edge_attr, params):
    """Pure-JAX reference mirroring the PyTorch forward (f32 end-to-end)."""
    x = jnp.concatenate([src, dest, edge_attr], axis=1)
    h = x @ params["w1"] + params["b1"]
    h = jnp.where(h >= 0.0, h, 0.01 * h)
    h = h @ params["w2"] + params["b2"]
    h = jnp.where(h >= 0.0, h, 0.01 * h)
    return h @ params["w3"] + params["b3"]


def init_params(key, node_features, edge_features, hidden_size, latent_edge_features):
    f_in = 2 * node_features + edge_features
    k = jax.random.split(key, 6)
    lim1 = 1.0 / jnp.sqrt(f_in)
    lim2 = 1.0 / jnp.sqrt(hidden_size)
    # PyTorch Linear init: U(-1/sqrt(fan_in), 1/sqrt(fan_in)); weights stored (in, out).
    return {
        "w1": jax.random.uniform(k[0], (f_in, hidden_size), jnp.float32, -lim1, lim1),
        "b1": jax.random.uniform(k[1], (1, hidden_size), jnp.float32, -lim1, lim1),
        "w2": jax.random.uniform(k[2], (hidden_size, hidden_size), jnp.float32, -lim2, lim2),
        "b2": jax.random.uniform(k[3], (1, hidden_size), jnp.float32, -lim2, lim2),
        "w3": jax.random.uniform(k[4], (hidden_size, latent_edge_features), jnp.float32, -lim2, lim2),
        "b3": jax.random.uniform(k[5], (1, latent_edge_features), jnp.float32, -lim2, lim2),
    }


if __name__ == "__main__":
    # Module defaults: node_features=5, edge_features=1, hidden_size=128,
    # latent_edge_features=32.  E chosen NOT a multiple of the tile so the
    # ragged last grid block is exercised.
    E = 100
    NODE_FEATURES, EDGE_FEATURES = 5, 1
    HIDDEN, LATENT = 128, 32

    key = jax.random.PRNGKey(0)
    ks, kd, ke, kp = jax.random.split(key, 4)

    src = jax.random.normal(ks, (E, NODE_FEATURES), jnp.float32)
    dest = jax.random.normal(kd, (E, NODE_FEATURES), jnp.float32)
    edge_attr = jax.random.normal(ke, (E, EDGE_FEATURES), jnp.float32)
    params = init_params(kp, NODE_FEATURES, EDGE_FEATURES, HIDDEN, LATENT)

    ref = _reference(src, dest, edge_attr, params)

    # f32 matmul path (tight tolerance); small tile -> 4 grid steps + ragged last block.
    out_f32 = jax.block_until_ready(
        edge_mlp_1_forward(src, dest, edge_attr, params,
                           tile_e=32, compute_dtype=jnp.float32))
    assert out_f32.shape == (E, LATENT)
    assert jnp.allclose(out_f32, ref, atol=1e-4, rtol=1e-4), "f32 mismatch vs reference"

    # Default path: bf16 MXU operands / f32 accumulation, auto-capped tile (2 grid steps).
    out_def = jax.block_until_ready(edge_mlp_1_forward(src, dest, edge_attr, params))
    assert out_def.shape == (E, LATENT)
    assert jnp.allclose(out_def, ref, atol=7.5e-2, rtol=7.5e-2), "bf16 mismatch vs reference"

    print("KERNEL_OK")
</pallas_src>

<mosaic_0001>
module attributes {stable_mosaic.version = 11 : i64} {
  func.func @_edge_mlp_1_kernel(%arg0: i32, %arg1: memref<32x5xf32, #tpu.memory_space<vmem>>, %arg2: memref<32x5xf32, #tpu.memory_space<vmem>>, %arg3: memref<32x1xf32, #tpu.memory_space<vmem>>, %arg4: memref<5x128xf32, #tpu.memory_space<vmem>>, %arg5: memref<5x128xf32, #tpu.memory_space<vmem>>, %arg6: memref<1x128xf32, #tpu.memory_space<vmem>>, %arg7: memref<1x128xf32, #tpu.memory_space<vmem>>, %arg8: memref<128x128xf32, #tpu.memory_space<vmem>>, %arg9: memref<1x128xf32, #tpu.memory_space<vmem>>, %arg10: memref<128x32xf32, #tpu.memory_space<vmem>>, %arg11: memref<1x32xf32, #tpu.memory_space<vmem>>, %arg12: memref<32x32xf32, #tpu.memory_space<vmem>>) attributes {dimension_semantics = [#tpu.dimension_semantics<parallel>], iteration_bounds = array<i64: 4>, scalar_prefetch = 0 : i64, scratch_operands = 0 : i64, tpu.core_type = #tpu.core_type<tc>, window_params = [{transform_indices = @transform_0, window_bounds = array<i64: 32, 5>}, {transform_indices = @transform_1, window_bounds = array<i64: 32, 5>}, {transform_indices = @transform_2, window_bounds = array<i64: 32, 1>}, {pipeline_mode = #tpu.pipeline_mode<synchronous>, transform_indices = @transform_3, window_bounds = array<i64: 5, 128>}, {pipeline_mode = #tpu.pipeline_mode<synchronous>, transform_indices = @transform_4, window_bounds = array<i64: 5, 128>}, {pipeline_mode = #tpu.pipeline_mode<synchronous>, transform_indices = @transform_5, window_bounds = array<i64: 1, 128>}, {pipeline_mode = #tpu.pipeline_mode<synchronous>, transform_indices = @transform_6, window_bounds = array<i64: 1, 128>}, {pipeline_mode = #tpu.pipeline_mode<synchronous>, transform_indices = @transform_7, window_bounds = array<i64: 128, 128>}, {pipeline_mode = #tpu.pipeline_mode<synchronous>, transform_indices = @transform_8, window_bounds = array<i64: 1, 128>}, {pipeline_mode = #tpu.pipeline_mode<synchronous>, transform_indices = @transform_9, window_bounds = array<i64: 128, 32>}, {pipeline_mode = #tpu.pipeline_mode<synchronous>, transform_indices = @transform_10, window_bounds = array<i64: 1, 32>}, {transform_indices = @transform_11, window_bounds = array<i64: 32, 32>}]} {
    %c0 = arith.constant 0 : index
    %c0_0 = arith.constant 0 : index
    %0 = vector.load %arg1[%c0, %c0_0] : memref<32x5xf32, #tpu.memory_space<vmem>>, vector<32x5xf32>
    %c0_1 = arith.constant 0 : index
    %c0_2 = arith.constant 0 : index
    %1 = vector.load %arg2[%c0_1, %c0_2] : memref<32x5xf32, #tpu.memory_space<vmem>>, vector<32x5xf32>
    %c0_3 = arith.constant 0 : index
    %c0_4 = arith.constant 0 : index
    %2 = vector.load %arg4[%c0_3, %c0_4] : memref<5x128xf32, #tpu.memory_space<vmem>>, vector<5x128xf32>
    %cst = arith.constant dense<0.000000e+00> : vector<32x128xf32>
    %3 = tpu.matmul %0, %2, %cst {dimension_numbers = #tpu.dot_dimension_numbers<[1], [0], [0], [1], [0, 0, 1, 1], [], []>} : vector<32x5xf32>, vector<5x128xf32>, vector<32x128xf32> -> vector<32x128xf32>
    %c0_5 = arith.constant 0 : index
    %c0_6 = arith.constant 0 : index
    %4 = vector.load %arg5[%c0_5, %c0_6] : memref<5x128xf32, #tpu.memory_space<vmem>>, vector<5x128xf32>
    %cst_7 = arith.constant dense<0.000000e+00> : vector<32x128xf32>
    %5 = tpu.matmul %1, %4, %cst_7 {dimension_numbers = #tpu.dot_dimension_numbers<[1], [0], [0], [1], [0, 0, 1, 1], [], []>} : vector<32x5xf32>, vector<5x128xf32>, vector<32x128xf32> -> vector<32x128xf32>
    %6 = arith.addf %3, %5 : vector<32x128xf32>
    %c0_8 = arith.constant 0 : index
    %c0_9 = arith.constant 0 : index
    %7 = vector.load %arg3[%c0_8, %c0_9] : memref<32x1xf32, #tpu.memory_space<vmem>>, vector<32x1xf32>
    %c0_10 = arith.constant 0 : index
    %c0_11 = arith.constant 0 : index
    %8 = vector.load %arg6[%c0_10, %c0_11] : memref<1x128xf32, #tpu.memory_space<vmem>>, vector<1x128xf32>
    %9 = vector.broadcast %7 : vector<32x1xf32> to vector<32x128xf32>
    %10 = vector.broadcast %8 : vector<1x128xf32> to vector<32x128xf32>
    %11 = arith.mulf %9, %10 : vector<32x128xf32>
    %12 = arith.addf %6, %11 : vector<32x128xf32>
    %c0_12 = arith.constant 0 : index
    %c0_13 = arith.constant 0 : index
    %13 = vector.load %arg7[%c0_12, %c0_13] : memref<1x128xf32, #tpu.memory_space<vmem>>, vector<1x128xf32>
    %14 = vector.broadcast %13 : vector<1x128xf32> to vector<32x128xf32>
    %15 = arith.addf %12, %14 : vector<32x128xf32>
    %cst_14 = arith.constant 0.000000e+00 : f32
    %16 = vector.broadcast %cst_14 : f32 to vector<32x128xf32>
    %17 = arith.cmpf oge, %15, %16 : vector<32x128xf32>
    %cst_15 = arith.constant 0.00999999977 : f32
    %18 = vector.broadcast %cst_15 : f32 to vector<32x128xf32>
    %19 = arith.mulf %18, %15 : vector<32x128xf32>
    %20 = arith.select %17, %15, %19 : vector<32x128xi1>, vector<32x128xf32>
    %c0_16 = arith.constant 0 : index
    %c0_17 = arith.constant 0 : index
    %21 = vector.load %arg8[%c0_16, %c0_17] : memref<128x128xf32, #tpu.memory_space<vmem>>, vector<128x128xf32>
    %cst_18 = arith.constant dense<0.000000e+00> : vector<32x128xf32>
    %22 = tpu.matmul %20, %21, %cst_18 {dimension_numbers = #tpu.dot_dimension_numbers<[1], [0], [0], [1], [0, 0, 1, 1], [], []>} : vector<32x128xf32>, vector<128x128xf32>, vector<32x128xf32> -> vector<32x128xf32>
    %c0_19 = arith.constant 0 : index
    %c0_20 = arith.constant 0 : index
    %23 = vector.load %arg9[%c0_19, %c0_20] : memref<1x128xf32, #tpu.memory_space<vmem>>, vector<1x128xf32>
    %24 = vector.broadcast %23 : vector<1x128xf32> to vector<32x128xf32>
    %25 = arith.addf %22, %24 : vector<32x128xf32>
    %cst_21 = arith.constant 0.000000e+00 : f32
    %26 = vector.broadcast %cst_21 : f32 to vector<32x128xf32>
    %27 = arith.cmpf oge, %25, %26 : vector<32x128xf32>
    %cst_22 = arith.constant 0.00999999977 : f32
    %28 = vector.broadcast %cst_22 : f32 to vector<32x128xf32>
    %29 = arith.mulf %28, %25 : vector<32x128xf32>
    %30 = arith.select %27, %25, %29 : vector<32x128xi1>, vector<32x128xf32>
    %c0_23 = arith.constant 0 : index
    %c0_24 = arith.constant 0 : index
    %31 = vector.load %arg10[%c0_23, %c0_24] : memref<128x32xf32, #tpu.memory_space<vmem>>, vector<128x32xf32>
    %cst_25 = arith.constant dense<0.000000e+00> : vector<32x32xf32>
    %32 = tpu.matmul %30, %31, %cst_25 {dimension_numbers = #tpu.dot_dimension_numbers<[1], [0], [0], [1], [0, 0, 1, 1], [], []>} : vector<32x128xf32>, vector<128x32xf32>, vector<32x32xf32> -> vector<32x32xf32>
    %c0_26 = arith.constant 0 : index
    %c0_27 = arith.constant 0 : index
    %33 = vector.load %arg11[%c0_26, %c0_27] : memref<1x32xf32, #tpu.memory_space<vmem>>, vector<1x32xf32>
    %34 = vector.broadcast %33 : vector<1x32xf32> to vector<32x32xf32>
    %35 = arith.addf %32, %34 : vector<32x32xf32>
    %c0_28 = arith.constant 0 : index
    %c0_29 = arith.constant 0 : index
    %36 = vector.load %arg12[%c0_28, %c0_29] : memref<32x32xf32, #tpu.memory_space<vmem>>, vector<32x32xf32>
    tpu.vector_store %arg12[%c0_28, %c0_29], %35 {strides = array<i32>} : memref<32x32xf32, #tpu.memory_space<vmem>>, vector<32x32xf32>,
    return
  }
  func.func @transform_0(%arg0: i32) -> (i32, i32) {
    %c0_i32 = arith.constant 0 : i32
    %c0_i32_0 = arith.constant 0 : i32
    return %arg0, %c0_i32 : i32, i32
  }
  func.func @transform_1(%arg0: i32) -> (i32, i32) {
    %c0_i32 = arith.constant 0 : i32
    %c0_i32_0 = arith.constant 0 : i32
    return %arg0, %c0_i32 : i32, i32
  }
  func.func @transform_2(%arg0: i32) -> (i32, i32) {
    %c0_i32 = arith.constant 0 : i32
    %c0_i32_0 = arith.constant 0 : i32
    return %arg0, %c0_i32 : i32, i32
  }
  func.func @transform_3(%arg0: i32) -> (i32, i32) {
    %c0_i32 = arith.constant 0 : i32
    %c0_i32_0 = arith.constant 0 : i32
    %c0_i32_1 = arith.constant 0 : i32
    return %c0_i32, %c0_i32_0 : i32, i32
  }
  func.func @transform_4(%arg0: i32) -> (i32, i32) {
    %c0_i32 = arith.constant 0 : i32
    %c0_i32_0 = arith.constant 0 : i32
    %c0_i32_1 = arith.constant 0 : i32
    return %c0_i32, %c0_i32_0 : i32, i32
  }
  func.func @transform_5(%arg0: i32) -> (i32, i32) {
    %c0_i32 = arith.constant 0 : i32
    %c0_i32_0 = arith.constant 0 : i32
    %c0_i32_1 = arith.constant 0 : i32
    return %c0_i32, %c0_i32_0 : i32, i32
  }
  func.func @transform_6(%arg0: i32) -> (i32, i32) {
    %c0_i32 = arith.constant 0 : i32
    %c0_i32_0 = arith.constant 0 : i32
    %c0_i32_1 = arith.constant 0 : i32
    return %c0_i32, %c0_i32_0 : i32, i32
  }
  func.func @transform_7(%arg0: i32) -> (i32, i32) {
    %c0_i32 = arith.constant 0 : i32
    %c0_i32_0 = arith.constant 0 : i32
    %c0_i32_1 = arith.constant 0 : i32
    return %c0_i32, %c0_i32_0 : i32, i32
  }
  func.func @transform_8(%arg0: i32) -> (i32, i32) {
    %c0_i32 = arith.constant 0 : i32
    %c0_i32_0 = arith.constant 0 : i32
    %c0_i32_1 = arith.constant 0 : i32
    return %c0_i32, %c0_i32_0 : i32, i32
  }
  func.func @transform_9(%arg0: i32) -> (i32, i32) {
    %c0_i32 = arith.constant 0 : i32
    %c0_i32_0 = arith.constant 0 : i32
    %c0_i32_1 = arith.constant 0 : i32
    return %c0_i32, %c0_i32_0 : i32, i32
  }
  func.func @transform_10(%arg0: i32) -> (i32, i32) {
    %c0_i32 = arith.constant 0 : i32
    %c0_i32_0 = arith.constant 0 : i32
    %c0_i32_1 = arith.constant 0 : i32
    return %c0_i32, %c0_i32_0 : i32, i32
  }
  func.func @transform_11(%arg0: i32) -> (i32, i32) {
    %c0_i32 = arith.constant 0 : i32
    %c0_i32_0 = arith.constant 0 : i32
    return %arg0, %c0_i32 : i32, i32
  }
}

</mosaic_0001>

<llo_original>
// kernel: tpu_custom_call.1
$region0: #{tpu_custom_call.1}
  #allocation0 [shape = 'u32[]', space=smem, size = 0x4, offset = 0x4, fixed_abs, tag = 'smem constant byte address 0x4 - core index']
  #allocation1 [shape = 'u32[72,128]{1,0:T(1,128)}', space=vmem, size = 0x9000, scoped, tag = 'internal scratch']
  %s0 = inlined_call_operand.vmem [shape: f32[100,5], index: 0, kind: input, shape index: {}]
  %s1 = inlined_call_operand.vmem [shape: f32[100,5], index: 1, kind: input, shape index: {}]
  %s2 = inlined_call_operand.vmem [shape: f32[100,1], index: 2, kind: input, shape index: {}]
  %s3 = inlined_call_operand.vmem [shape: f32[5,128], index: 3, kind: input, shape index: {}]
  %s4 = inlined_call_operand.vmem [shape: f32[5,128], index: 4, kind: input, shape index: {}]
  %s5 = inlined_call_operand.vmem [shape: f32[1,128], index: 5, kind: input, shape index: {}]
  %s6 = inlined_call_operand.vmem [shape: f32[1,128], index: 6, kind: input, shape index: {}]
  %s7 = inlined_call_operand.vmem [shape: f32[128,128], index: 7, kind: input, shape index: {}]
  %s8 = inlined_call_operand.vmem [shape: f32[1,128], index: 8, kind: input, shape index: {}]
  %s9 = inlined_call_operand.vmem [shape: f32[128,32], index: 9, kind: input, shape index: {}]
  %s10 = inlined_call_operand.vmem [shape: f32[1,32], index: 10, kind: input, shape index: {}]
  %s11 = inlined_call_operand.vmem [shape: f32[100,32], index: 11, kind: output, shape index: {}]
  %s12 = sld [smem:[#allocation0]]
  $region125: #{tpu_custom_call.1} parent=0
    _
  %s14 = ssub.s32 1, %s12
  %s15 = scalar_select 0, %s14, %s12
  $region1: #{tpu_custom_call.1} parent=0
    #allocation2 [shape = 'u8[32768]{0}', space=vmem, size = 0x8000, scoped, tag = 'output window, operand 0']
    loop: start=0, step=1, limit=6
    $region2: #{tpu_custom_call.1} parent=1 // loop_pre_header
      _
    $region3: #{tpu_custom_call.1} parent=1 // loop_header
      %s17 = sphi 0, %s21
      %p18 = scmp.ge.s32.totalorder %s17, 6
      %s27 = sphi 0, %s29
      %s30 = sphi 0, %s27
      %s31 = sphi 0, %s30
      %s47 = sphi 0, %s31
      %s53 = sphi 0, %s55
      %s56 = sphi 0, %s53
      %s57 = sphi 0, %s56
      %s73 = sphi 0, %s57
      %s79 = sphi 0, %s81
      %s82 = sphi 0, %s79
      %s83 = sphi 0, %s82
      %s99 = sphi 0, %s83
      %s103 = sphi 0, %s103
      %s105 = sphi 0, %s103
      %s106 = sphi 0, %s105
      %s120 = sphi 0, %s106
      %s124 = sphi 0, %s124
      %s126 = sphi 0, %s124
      %s127 = sphi 0, %s126
      %s141 = sphi 0, %s127
      %s145 = sphi 0, %s145
      %s147 = sphi 0, %s145
      %s148 = sphi 0, %s147
      %s162 = sphi 0, %s148
      %s166 = sphi 0, %s166
      %s168 = sphi 0, %s166
      %s169 = sphi 0, %s168
      %s183 = sphi 0, %s169
      %s187 = sphi 0, %s187
      %s189 = sphi 0, %s187
      %s190 = sphi 0, %s189
      %s204 = sphi 0, %s190
      %s208 = sphi 0, %s208
      %s210 = sphi 0, %s208
      %s211 = sphi 0, %s210
      %s225 = sphi 0, %s211
      %s229 = sphi 0, %s229
      %s231 = sphi 0, %s229
      %s232 = sphi 0, %s231
      %s246 = sphi 0, %s232
      %s250 = sphi 0, %s250
      %s252 = sphi 0, %s250
      %s253 = sphi 0, %s252
      %s267 = sphi 0, %s253
      %s273 = sphi 0, %s275
      %s276 = sphi 0, %s273
      %s277 = sphi 0, %s276
      %s293 = sphi 0, %s277
    $region4: #{tpu_custom_call.1} parent=1 // loop_header_branch
      %20 = sbr.rel (%p18) target = $region8
    $region5: #{tpu_custom_call.1} parent=1 // loop_body
      %s22 = ssub.s32 %s17, 1
      %s23 = ssub.s32 %s17, 2
      %s24 = sadd.s32 %s17, 1
      %s25 = ssub.s32 %s17, %s24
      %p26 = scmp.eq.s32.totalorder %s25, 0
      %s28 = sadd.s32 %s27, 1
      %s29 = scalar_select %p26, %s27, %s28
      %p32 = pneg %p26
      %p33 = scmp.eq.s32.totalorder %s17, 3
      %p34 = por %p32, %p33
      %p35 = scmp.ne.s32.totalorder %s27, %s30
      %p36 = scmp.eq.s32.totalorder %s17, 0
      %p37 = por %p35, %p36
      %p38 = scmp.ne.s32.totalorder %s27, %s30
      %p39 = scmp.eq.s32.totalorder %s22, 3
      %p40 = por %p38, %p39
      %p41 = scmp.ne.s32.totalorder %s30, %s31
      %p42 = scmp.eq.s32.totalorder %s22, 0
      %p43 = por %p41, %p42
      %p44 = scmp.ne.s32.totalorder %s30, %s31
      %p45 = scmp.eq.s32.totalorder %s23, 3
      %p46 = por %p44, %p45
      %p48 = scmp.ne.s32.totalorder %s31, %s47
      %p49 = scmp.eq.s32.totalorder %s23, 0
      %p50 = por %p48, %p49
      %s51 = ssub.s32 %s17, %s24
      %p52 = scmp.eq.s32.totalorder %s51, 0
      %s54 = sadd.s32 %s53, 1
      %s55 = scalar_select %p52, %s53, %s54
      %p58 = pneg %p52
      %p59 = scmp.eq.s32.totalorder %s17, 3
      %p60 = por %p58, %p59
      %p61 = scmp.ne.s32.totalorder %s53, %s56
      %p62 = scmp.eq.s32.totalorder %s17, 0
      %p63 = por %p61, %p62
      %p64 = scmp.ne.s32.totalorder %s53, %s56
      %p65 = scmp.eq.s32.totalorder %s22, 3
      %p66 = por %p64, %p65
      %p67 = scmp.ne.s32.totalorder %s56, %s57
      %p68 = scmp.eq.s32.totalorder %s22, 0
      %p69 = por %p67, %p68
      %p70 = scmp.ne.s32.totalorder %s56, %s57
      %p71 = scmp.eq.s32.totalorder %s23, 3
      %p72 = por %p70, %p71
      %p74 = scmp.ne.s32.totalorder %s57, %s73
      %p75 = scmp.eq.s32.totalorder %s23, 0
      %p76 = por %p74, %p75
      %s77 = ssub.s32 %s17, %s24
      %p78 = scmp.eq.s32.totalorder %s77, 0
      %s80 = sadd.s32 %s79, 1
      %s81 = scalar_select %p78, %s79, %s80
      %p84 = pneg %p78
      %p85 = scmp.eq.s32.totalorder %s17, 3
      %p86 = por %p84, %p85
      %p87 = scmp.ne.s32.totalorder %s79, %s82
      %p88 = scmp.eq.s32.totalorder %s17, 0
      %p89 = por %p87, %p88
      %p90 = scmp.ne.s32.totalorder %s79, %s82
      %p91 = scmp.eq.s32.totalorder %s22, 3
      %p92 = por %p90, %p91
      %p93 = scmp.ne.s32.totalorder %s82, %s83
      %p94 = scmp.eq.s32.totalorder %s22, 0
      %p95 = por %p93, %p94
      %p96 = scmp.ne.s32.totalorder %s82, %s83
      %p97 = scmp.eq.s32.totalorder %s23, 3
      %p98 = por %p96, %p97
      %p100 = scmp.ne.s32.totalorder %s83, %s99
      %p101 = scmp.eq.s32.totalorder %s23, 0
      %p102 = por %p100, %p101
      %s104 = sadd.s32 %s103, 1
      %p107 = scmp.eq.s32.totalorder %s17, 3
      %p108 = scmp.ne.s32.totalorder %s103, %s105
      %p109 = scmp.eq.s32.totalorder %s17, 0
      %p110 = por %p108, %p109
      %p111 = scmp.ne.s32.totalorder %s103, %s105
      %p112 = scmp.eq.s32.totalorder %s22, 3
      %p113 = por %p111, %p112
      %p114 = scmp.ne.s32.totalorder %s105, %s106
      %p115 = scmp.eq.s32.totalorder %s22, 0
      %p116 = por %p114, %p115
      %p117 = scmp.ne.s32.totalorder %s105, %s106
      %p118 = scmp.eq.s32.totalorder %s23, 3
      %p119 = por %p117, %p118
      %p121 = scmp.ne.s32.totalorder %s106, %s120
      %p122 = scmp.eq.s32.totalorder %s23, 0
      %p123 = por %p121, %p122
      %s125 = sadd.s32 %s124, 1
      %p128 = scmp.eq.s32.totalorder %s17, 3
      %p129 = scmp.ne.s32.totalorder %s124, %s126
      %p130 = scmp.eq.s32.totalorder %s17, 0
      %p131 = por %p129, %p130
      %p132 = scmp.ne.s32.totalorder %s124, %s126
      %p133 = scmp.eq.s32.totalorder %s22, 3
      %p134 = por %p132, %p133
      %p135 = scmp.ne.s32.totalorder %s126, %s127
      %p136 = scmp.eq.s32.totalorder %s22, 0
      %p137 = por %p135, %p136
      %p138 = scmp.ne.s32.totalorder %s126, %s127
      %p139 = scmp.eq.s32.totalorder %s23, 3
      %p140 = por %p138, %p139
      %p142 = scmp.ne.s32.totalorder %s127, %s141
      %p143 = scmp.eq.s32.totalorder %s23, 0
      %p144 = por %p142, %p143
      %s146 = sadd.s32 %s145, 1
      %p149 = scmp.eq.s32.totalorder %s17, 3
      %p150 = scmp.ne.s32.totalorder %s145, %s147
      %p151 = scmp.eq.s32.totalorder %s17, 0
      %p152 = por %p150, %p151
      %p153 = scmp.ne.s32.totalorder %s145, %s147
      %p154 = scmp.eq.s32.totalorder %s22, 3
      %p155 = por %p153, %p154
      %p156 = scmp.ne.s32.totalorder %s147, %s148
      %p157 = scmp.eq.s32.totalorder %s22, 0
      %p158 = por %p156, %p157
      %p159 = scmp.ne.s32.totalorder %s147, %s148
      %p160 = scmp.eq.s32.totalorder %s23, 3
      %p161 = por %p159, %p160
      %p163 = scmp.ne.s32.totalorder %s148, %s162
      %p164 = scmp.eq.s32.totalorder %s23, 0
      %p165 = por %p163, %p164
      %s167 = sadd.s32 %s166, 1
      %p170 = scmp.eq.s32.totalorder %s17, 3
      %p171 = scmp.ne.s32.totalorder %s166, %s168
      %p172 = scmp.eq.s32.totalorder %s17, 0
      %p173 = por %p171, %p172
      %p174 = scmp.ne.s32.totalorder %s166, %s168
      %p175 = scmp.eq.s32.totalorder %s22, 3
      %p176 = por %p174, %p175
      %p177 = scmp.ne.s32.totalorder %s168, %s169
      %p178 = scmp.eq.s32.totalorder %s22, 0
      %p179 = por %p177, %p178
      %p180 = scmp.ne.s32.totalorder %s168, %s169
      %p181 = scmp.eq.s32.totalorder %s23, 3
      %p182 = por %p180, %p181
      %p184 = scmp.ne.s32.totalorder %s169, %s183
      %p185 = scmp.eq.s32.totalorder %s23, 0
      %p186 = por %p184, %p185
      %s188 = sadd.s32 %s187, 1
      %p191 = scmp.eq.s32.totalorder %s17, 3
      %p192 = scmp.ne.s32.totalorder %s187, %s189
      %p193 = scmp.eq.s32.totalorder %s17, 0
      %p194 = por %p192, %p193
      %p195 = scmp.ne.s32.totalorder %s187, %s189
      %p196 = scmp.eq.s32.totalorder %s22, 3
      %p197 = por %p195, %p196
      %p198 = scmp.ne.s32.totalorder %s189, %s190
      %p199 = scmp.eq.s32.totalorder %s22, 0
      %p200 = por %p198, %p199
      %p201 = scmp.ne.s32.totalorder %s189, %s190
      %p202 = scmp.eq.s32.totalorder %s23, 3
      %p203 = por %p201, %p202
      %p205 = scmp.ne.s32.totalorder %s190, %s204
      %p206 = scmp.eq.s32.totalorder %s23, 0
      %p207 = por %p205, %p206
      %s209 = sadd.s32 %s208, 1
      %p212 = scmp.eq.s32.totalorder %s17, 3
      %p213 = scmp.ne.s32.totalorder %s208, %s210
      %p214 = scmp.eq.s32.totalorder %s17, 0
      %p215 = por %p213, %p214
      %p216 = scmp.ne.s32.totalorder %s208, %s210
      %p217 = scmp.eq.s32.totalorder %s22, 3
      %p218 = por %p216, %p217
      %p219 = scmp.ne.s32.totalorder %s210, %s211
      %p220 = scmp.eq.s32.totalorder %s22, 0
      %p221 = por %p219, %p220
      %p222 = scmp.ne.s32.totalorder %s210, %s211
      %p223 = scmp.eq.s32.totalorder %s23, 3
      %p224 = por %p222, %p223
      %p226 = scmp.ne.s32.totalorder %s211, %s225
      %p227 = scmp.eq.s32.totalorder %s23, 0
      %p228 = por %p226, %p227
      %s230 = sadd.s32 %s229, 1
      %p233 = scmp.eq.s32.totalorder %s17, 3
      %p234 = scmp.ne.s32.totalorder %s229, %s231
      %p235 = scmp.eq.s32.totalorder %s17, 0
      %p236 = por %p234, %p235
      %p237 = scmp.ne.s32.totalorder %s229, %s231
      %p238 = scmp.eq.s32.totalorder %s22, 3
      %p239 = por %p237, %p238
      %p240 = scmp.ne.s32.totalorder %s231, %s232
      %p241 = scmp.eq.s32.totalorder %s22, 0
      %p242 = por %p240, %p241
      %p243 = scmp.ne.s32.totalorder %s231, %s232
      %p244 = scmp.eq.s32.totalorder %s23, 3
      %p245 = por %p243, %p244
      %p247 = scmp.ne.s32.totalorder %s232, %s246
      %p248 = scmp.eq.s32.totalorder %s23, 0
      %p249 = por %p247, %p248
      %s251 = sadd.s32 %s250, 1
      %p254 = scmp.eq.s32.totalorder %s17, 3
      %p255 = scmp.ne.s32.totalorder %s250, %s252
      %p256 = scmp.eq.s32.totalorder %s17, 0
      %p257 = por %p255, %p256
      %p258 = scmp.ne.s32.totalorder %s250, %s252
      %p259 = scmp.eq.s32.totalorder %s22, 3
      %p260 = por %p258, %p259
      %p261 = scmp.ne.s32.totalorder %s252, %s253
      %p262 = scmp.eq.s32.totalorder %s22, 0
      %p263 = por %p261, %p262
      %p264 = scmp.ne.s32.totalorder %s252, %s253
      %p265 = scmp.eq.s32.totalorder %s23, 3
      %p266 = por %p264, %p265
      %p268 = scmp.ne.s32.totalorder %s253, %s267
      %p269 = scmp.eq.s32.totalorder %s23, 0
      %p270 = por %p268, %p269
      %s271 = ssub.s32 %s17, %s24
      %p272 = scmp.eq.s32.totalorder %s271, 0
      %s274 = sadd.s32 %s273, 1
      %s275 = scalar_select %p272, %s273, %s274
      %p278 = pneg %p272
      %p279 = scmp.eq.s32.totalorder %s17, 3
      %p280 = por %p278, %p279
      %p281 = scmp.ne.s32.totalorder %s273, %s276
      %p282 = scmp.eq.s32.totalorder %s17, 0
      %p283 = por %p281, %p282
      %p284 = scmp.ne.s32.totalorder %s273, %s276
      %p285 = scmp.eq.s32.totalorder %s22, 3
      %p286 = por %p284, %p285
      %p287 = scmp.ne.s32.totalorder %s276, %s277
      %p288 = scmp.eq.s32.totalorder %s22, 0
      %p289 = por %p287, %p288
      %p290 = scmp.ne.s32.totalorder %s276, %s277
      %p291 = scmp.eq.s32.totalorder %s23, 3
      %p292 = por %p290, %p291
      %p294 = scmp.ne.s32.totalorder %s277, %s293
      %p295 = scmp.eq.s32.totalorder %s23, 0
      %p296 = por %p294, %p295
      %p297 = scmp.le.s32.totalorder 1, %s17
      %p298 = scmp.lt.s32.totalorder %s17, 5
      %p299 = pnand %p297, %p298
      %p300 = pneg %p299
      // Predicated region
      $region9: #{tpu_custom_call.1} parent=5 // pred_check
        _
      $region10: #{tpu_custom_call.1} parent=5 // pred_check_branch
        %302 = sbr.rel (%p299) target = $region12
      $region11: #{tpu_custom_call.1} parent=5 // pred_region
        %s303 = ssub.s32 %s17, 1
        // Predicated region
        $region13: #{tpu_custom_call.1} parent=11 // pred_check
          %p304 = pneg %p116
        $region14: #{tpu_custom_call.1} parent=11 // pred_check_branch
          %306 = sbr.rel (%p304) target = $region16
        $region15: #{tpu_custom_call.1} parent=11 // pred_region
          _
        $region16: #{tpu_custom_call.1} parent=11 // pred_fallthru
          _
        // Predicated region
        $region17: #{tpu_custom_call.1} parent=11 // pred_check
          %p307 = pneg %p137
        $region18: #{tpu_custom_call.1} parent=11 // pred_check_branch
          %309 = sbr.rel (%p307) target = $region20
        $region19: #{tpu_custom_call.1} parent=11 // pred_region
          _
        $region20: #{tpu_custom_call.1} parent=11 // pred_fallthru
          _
        // Predicated region
        $region21: #{tpu_custom_call.1} parent=11 // pred_check
          %p310 = pneg %p158
        $region22: #{tpu_custom_call.1} parent=11 // pred_check_branch
          %312 = sbr.rel (%p310) target = $region24
        $region23: #{tpu_custom_call.1} parent=11 // pred_region
          _
        $region24: #{tpu_custom_call.1} parent=11 // pred_fallthru
          _
        // Predicated region
        $region25: #{tpu_custom_call.1} parent=11 // pred_check
          %p313 = pneg %p179
        $region26: #{tpu_custom_call.1} parent=11 // pred_check_branch
          %315 = sbr.rel (%p313) target = $region28
        $region27: #{tpu_custom_call.1} parent=11 // pred_region
          _
        $region28: #{tpu_custom_call.1} parent=11 // pred_fallthru
          _
        // Predicated region
        $region29: #{tpu_custom_call.1} parent=11 // pred_check
          %p316 = pneg %p200
        $region30: #{tpu_custom_call.1} parent=11 // pred_check_branch
          %318 = sbr.rel (%p316) target = $region32
        $region31: #{tpu_custom_call.1} parent=11 // pred_region
          _
        $region32: #{tpu_custom_call.1} parent=11 // pred_fallthru
          _
        // Predicated region
        $region33: #{tpu_custom_call.1} parent=11 // pred_check
          %p319 = pneg %p221
        $region34: #{tpu_custom_call.1} parent=11 // pred_check_branch
          %321 = sbr.rel (%p319) target = $region36
        $region35: #{tpu_custom_call.1} parent=11 // pred_region
          _
        $region36: #{tpu_custom_call.1} parent=11 // pred_fallthru
          _
        // Predicated region
        $region37: #{tpu_custom_call.1} parent=11 // pred_check
          %p322 = pneg %p242
        $region38: #{tpu_custom_call.1} parent=11 // pred_check_branch
          %324 = sbr.rel (%p322) target = $region40
        $region39: #{tpu_custom_call.1} parent=11 // pred_region
          _
        $region40: #{tpu_custom_call.1} parent=11 // pred_fallthru
          _
        // Predicated region
        $region41: #{tpu_custom_call.1} parent=11 // pred_check
          %p325 = pneg %p263
        $region42: #{tpu_custom_call.1} parent=11 // pred_check_branch
          %327 = sbr.rel (%p325) target = $region44
        $region43: #{tpu_custom_call.1} parent=11 // pred_region
          _
        $region44: #{tpu_custom_call.1} parent=11 // pred_fallthru
          _
      $region12: #{tpu_custom_call.1} parent=5 // pred_fallthru
        _
      %p328 = scmp.lt.s32.totalorder %s17, 4
      // Predicated region
      $region45: #{tpu_custom_call.1} parent=5 // pred_check
        %p329 = pneg %p328
      $region46: #{tpu_custom_call.1} parent=5 // pred_check_branch
        %331 = sbr.rel (%p329) target = $region48
      $region47: #{tpu_custom_call.1} parent=5 // pred_region
        // Predicated region
        $region49: #{tpu_custom_call.1} parent=47 // pred_check
          %p332 = pneg %p37
        $region50: #{tpu_custom_call.1} parent=47 // pred_check_branch
          %334 = sbr.rel (%p332) target = $region52
        $region51: #{tpu_custom_call.1} parent=47 // pred_region
          %s335 = smul.u32 4, %s17
          %s336 = ssub.s32 13, %s335
          %p337 = scmp.lt.s32.totalorder %s336, 4
          %s338 = scalar_select %p337, %s336, 4
          %s339 = smul.u32 8, %s338
          %p340 = scmp.lt.s32.totalorder %s335, 12
          %s341 = scalar_select %p340, %s335, 12
          %s342 = smul.addr %s341, 8
          %s343 = scalar_lea.vmem %s0, %s342
          %s344 = smul.u32 4, %s17
          %s345 = ssub.s32 13, %s344
          %p346 = scmp.lt.s32.totalorder %s345, 4
          %s347 = scalar_select %p346, %s345, 4
          %s348 = smul.u32 8, %s347
        $region52: #{tpu_custom_call.1} parent=47 // pred_fallthru
          _
        // Predicated region
        $region53: #{tpu_custom_call.1} parent=47 // pred_check
          %p349 = pneg %p63
        $region54: #{tpu_custom_call.1} parent=47 // pred_check_branch
          %351 = sbr.rel (%p349) target = $region56
        $region55: #{tpu_custom_call.1} parent=47 // pred_region
          %s352 = smul.u32 4, %s17
          %s353 = ssub.s32 13, %s352
          %p354 = scmp.lt.s32.totalorder %s353, 4
          %s355 = scalar_select %p354, %s353, 4
          %s356 = smul.u32 8, %s355
          %p357 = scmp.lt.s32.totalorder %s352, 12
          %s358 = scalar_select %p357, %s352, 12
          %s359 = smul.addr %s358, 8
          %s360 = scalar_lea.vmem %s1, %s359
          %s361 = smul.u32 4, %s17
          %s362 = ssub.s32 13, %s361
          %p363 = scmp.lt.s32.totalorder %s362, 4
          %s364 = scalar_select %p363, %s362, 4
          %s365 = smul.u32 8, %s364
        $region56: #{tpu_custom_call.1} parent=47 // pred_fallthru
          _
        // Predicated region
        $region57: #{tpu_custom_call.1} parent=47 // pred_check
          %p366 = pneg %p89
        $region58: #{tpu_custom_call.1} parent=47 // pred_check_branch
          %368 = sbr.rel (%p366) target = $region60
        $region59: #{tpu_custom_call.1} parent=47 // pred_region
          %s369 = smul.u32 4, %s17
          %s370 = ssub.s32 13, %s369
          %p371 = scmp.lt.s32.totalorder %s370, 4
          %s372 = scalar_select %p371, %s370, 4
          %s373 = smul.u32 8, %s372
          %p374 = scmp.lt.s32.totalorder %s369, 12
          %s375 = scalar_select %p374, %s369, 12
          %s376 = smul.addr %s375, 8
          %s377 = scalar_lea.vmem %s2, %s376
          %s378 = smul.u32 4, %s17
          %s379 = ssub.s32 13, %s378
          %p380 = scmp.lt.s32.totalorder %s379, 4
          %s381 = scalar_select %p380, %s379, 4
          %s382 = smul.u32 8, %s381
        $region60: #{tpu_custom_call.1} parent=47 // pred_fallthru
          _
      $region48: #{tpu_custom_call.1} parent=5 // pred_fallthru
        _
      %p383 = scmp.le.s32.totalorder 1, %s17
      %p384 = scmp.lt.s32.totalorder %s17, 5
      %p385 = pnand %p383, %p384
      %p386 = pneg %p385
      // Predicated region
      $region61: #{tpu_custom_call.1} parent=5 // pred_check
        _
      $region62: #{tpu_custom_call.1} parent=5 // pred_check_branch
        %388 = sbr.rel (%p385) target = $region64
      $region63: #{tpu_custom_call.1} parent=5 // pred_region
        %s389 = ssub.s32 %s17, 1
        %s390 = smul.u32 4, %s22
        %s391 = ssub.s32 13, %s390
        %p392 = scmp.lt.s32.totalorder %s391, 4
        %s393 = scalar_select %p392, %s391, 4
        %s394 = smul.u32 8, %s393
        %p395 = scmp.lt.s32.totalorder %s390, 12
        %s396 = scalar_select %p395, %s390, 12
        %s397 = smul.addr %s396, 8
        %s398 = scalar_lea.vmem %s0, %s397
        %p399 = pneg %p43
        %p400 = pneg %p40
        %s401 = smul.u32 4, %s22
        %s402 = ssub.s32 13, %s401
        %p403 = scmp.lt.s32.totalorder %s402, 4
        %s404 = scalar_select %p403, %s402, 4
        %s405 = smul.u32 8, %s404
        %p406 = scmp.lt.s32.totalorder %s401, 12
        %s407 = scalar_select %p406, %s401, 12
        %s408 = smul.addr %s407, 8
        %s409 = scalar_lea.vmem %s1, %s408
        %p410 = pneg %p69
        %p411 = pneg %p66
        %s412 = smul.u32 4, %s22
        %s413 = ssub.s32 13, %s412
        %p414 = scmp.lt.s32.totalorder %s413, 4
        %s415 = scalar_select %p414, %s413, 4
        %s416 = smul.u32 8, %s415
        %p417 = scmp.lt.s32.totalorder %s412, 12
        %s418 = scalar_select %p417, %s412, 12
        %s419 = smul.addr %s418, 8
        %s420 = scalar_lea.vmem %s2, %s419
        %p421 = pneg %p95
        %p422 = pneg %p92
        %p423 = pneg %p116
        %p424 = pneg %p113
        %p425 = pneg %p137
        %p426 = pneg %p134
        %p427 = pneg %p158
        %p428 = pneg %p155
        %p429 = pneg %p179
        %p430 = pneg %p176
        %p431 = pneg %p200
        %p432 = pneg %p197
        %p433 = pneg %p221
        %p434 = pneg %p218
        %p435 = pneg %p242
        %p436 = pneg %p239
        %p437 = pneg %p263
        %p438 = pneg %p260
        %p439 = pneg %p289
        %p440 = pneg %p286
        %s441 = sand.u32 %s276, 1
        %s442 = sand.u32 %s276, 1
        %s443 = smul.addr %s442, 32
        %s444 = scalar_lea.vmem [#allocation2], %s443
        %s445 = smul.u32 4, %s22
        %s446 = ssub.s32 13, %s445
        %p447 = scmp.lt.s32.totalorder %s446, 4
        %s448 = scalar_select %p447, %s446, 4
        %s449 = smul.u32 8, %s448
        %p450 = scmp.lt.s32.totalorder %s445, 12
        %s451 = scalar_select %p450, %s445, 12
        %s452 = smul.addr %s451, 8
        %s453 = scalar_lea.vmem %s0, %s452
        %s454 = smul.u32 4, %s22
        %s455 = ssub.s32 13, %s454
        %p456 = scmp.lt.s32.totalorder %s455, 4
        %s457 = scalar_select %p456, %s455, 4
        %s458 = smul.u32 8, %s457
        %s459 = smul.u32 4, %s22
        %s460 = ssub.s32 13, %s459
        %p461 = scmp.lt.s32.totalorder %s460, 4
        %s462 = scalar_select %p461, %s460, 4
        %s463 = smul.u32 8, %s462
        %p464 = scmp.lt.s32.totalorder %s459, 12
        %s465 = scalar_select %p464, %s459, 12
        %s466 = smul.addr %s465, 8
        %s467 = scalar_lea.vmem %s1, %s466
        %s468 = smul.u32 4, %s22
        %s469 = ssub.s32 13, %s468
        %p470 = scmp.lt.s32.totalorder %s469, 4
        %s471 = scalar_select %p470, %s469, 4
        %s472 = smul.u32 8, %s471
        %s473 = smul.u32 4, %s22
        %s474 = ssub.s32 13, %s473
        %p475 = scmp.lt.s32.totalorder %s474, 4
        %s476 = scalar_select %p475, %s474, 4
        %s477 = smul.u32 8, %s476
        %p478 = scmp.lt.s32.totalorder %s473, 12
        %s479 = scalar_select %p478, %s473, 12
        %s480 = smul.addr %s479, 8
        %s481 = scalar_lea.vmem %s2, %s480
        %s482 = smul.u32 4, %s22
        %s483 = ssub.s32 13, %s482
        %p484 = scmp.lt.s32.totalorder %s483, 4
        %s485 = scalar_select %p484, %s483, 4
        %s486 = smul.u32 8, %s485
        %s487 = smul.u32 4, %s22
        %s488 = ssub.s32 13, %s487
        %p489 = scmp.lt.s32.totalorder %s488, 4
        %s490 = scalar_select %p489, %s488, 4
        %s491 = smul.u32 8, %s490
        %v492 = vld [vmem:[%s453] sm:$0xff]
        %v493 = vld [vmem:[%s453 + $0x8] sm:$0xff]
        %v494 = vld [vmem:[%s453 + $0x10] sm:$0xff]
        %v495 = vld [vmem:[%s453 + $0x18] sm:$0xff]
        %v496 = vld [vmem:[%s467] sm:$0xff]
        %v497 = vld [vmem:[%s467 + $0x8] sm:$0xff]
        %v498 = vld [vmem:[%s467 + $0x10] sm:$0xff]
        %v499 = vld [vmem:[%s467 + $0x18] sm:$0xff]
        %v500 = vld [vmem:[%s3] sm:$0x1f]
        %v501 = vld [vmem:[%s4] sm:$0x1f]
        %vm502 = vcmask 39936
        %v504 = vsel %vm502, %v496, 0
        %v507 = vsel %vm502, %v497, 0
        %v510 = vsel %vm502, %v498, 0
        %v513 = vsel %vm502, %v499, 0
        %vm515 = vcmask 1044480
        %v517 = vsel %vm515, %v501, 0
        %519 = vmatpush.msra.mxu0 0.0
        %520 = vmatpush.msra.mxu0 0.0
        %521 = vmatpush.msra.mxu0 0.0
        %522 = vmatpush.msra.mxu0 0.0
        %523 = vmatpush.msra.mxu0 0.0
        %524 = vmatpush.msra.mxu0 0.0
        %525 = vmatpush.msra.mxu0 0.0
        %526 = vmatpush.msra.mxu0 0.0
        %527 = vmatpush.msra.mxu0 0.0
        %528 = vmatpush.msra.mxu0 0.0
        %529 = vmatpush.msra.mxu0 0.0
        %530 = vmatpush.msra.mxu0 0.0
        %531 = vmatpush.msra.mxu0 0.0
        %532 = vmatpush.msra.mxu0 0.0
        %533 = vmatpush.msra.mxu0 0.0
        %534 = vmatpush.msra.mxu0 %v517
        %535 = vmatmul.f32.gmra.mxu0 %v504
        %v536 = vpop.f32.mrf.mxu0
        %v537 = vadd.f32 0.0, %v536
        %538 = vmatmul.f32.gmra.mxu0 %v507
        %v539 = vpop.f32.mrf.mxu0
        %v540 = vadd.f32 0.0, %v539
        %541 = vmatmul.f32.gmra.mxu0 %v510
        %v542 = vpop.f32.mrf.mxu0
        %v543 = vadd.f32 0.0, %v542
        %544 = vmatmul.f32.gmra.mxu0 %v513
        %v545 = vpop.f32.mrf.mxu0
        %v546 = vadd.f32 0.0, %v545
        %547 = vdwg.mxu0
        %v549 = vsel %vm502, %v492, 0
        %v552 = vsel %vm502, %v493, 0
        %v555 = vsel %vm502, %v494, 0
        %v558 = vsel %vm502, %v495, 0
        %v561 = vsel %vm515, %v500, 0
        %563 = vmatpush.msra.mxu0 0.0
        %564 = vmatpush.msra.mxu0 0.0
        %565 = vmatpush.msra.mxu0 0.0
        %566 = vmatpush.msra.mxu0 0.0
        %567 = vmatpush.msra.mxu0 0.0
        %568 = vmatpush.msra.mxu0 0.0
        %569 = vmatpush.msra.mxu0 0.0
        %570 = vmatpush.msra.mxu0 0.0
        %571 = vmatpush.msra.mxu0 0.0
        %572 = vmatpush.msra.mxu0 0.0
        %573 = vmatpush.msra.mxu0 0.0
        %574 = vmatpush.msra.mxu0 0.0
        %575 = vmatpush.msra.mxu0 0.0
        %576 = vmatpush.msra.mxu0 0.0
        %577 = vmatpush.msra.mxu0 0.0
        %578 = vmatpush.msra.mxu0 %v561
        %579 = vmatmul.f32.gmra.mxu0 %v549
        %v580 = vpop.f32.mrf.mxu0
        %v581 = vadd.f32 %v537, %v580
        %582 = vmatmul.f32.gmra.mxu0 %v552
        %v583 = vpop.f32.mrf.mxu0
        %v584 = vadd.f32 %v540, %v583
        %585 = vmatmul.f32.gmra.mxu0 %v555
        %v586 = vpop.f32.mrf.mxu0
        %v587 = vadd.f32 %v543, %v586
        %588 = vmatmul.f32.gmra.mxu0 %v558
        %v589 = vpop.f32.mrf.mxu0
        %v590 = vadd.f32 %v546, %v589
        %591 = vdwg.mxu0
        %v592 = vld [vmem:[%s481] sm:$0xff]
        %v593 = vld [vmem:[%s481 + $0x8] sm:$0xff]
        %v594 = vld [vmem:[%s481 + $0x10] sm:$0xff]
        %v595 = vld [vmem:[%s481 + $0x18] sm:$0xff]
        %v596 = vld [vmem:[%s5] sm:$0x1]
        %598 = vset.pattern.permute.xlu0 0
        %599 = vperm.xlu0 %598, %v592
        %v600 = vpop.permute.xlu0 %599
        %603 = vset.pattern.permute.xlu0 0
        %604 = vperm.xlu0 %603, %v593
        %v605 = vpop.permute.xlu0 %604
        %608 = vset.pattern.permute.xlu0 0
        %609 = vperm.xlu0 %608, %v594
        %v610 = vpop.permute.xlu0 %609
        %613 = vset.pattern.permute.xlu0 0
        %614 = vperm.xlu0 %613, %v595
        %v615 = vpop.permute.xlu0 %614
        %v618 = vperm.slane %v596, 0
        %v620 = vmul.f32 %v600, %v618
        %v621 = vmul.f32 %v605, %v618
        %v622 = vmul.f32 %v610, %v618
        %v623 = vmul.f32 %v615, %v618
        %v624 = vadd.f32 %v581, %v620
        %v625 = vadd.f32 %v584, %v621
        %v626 = vadd.f32 %v587, %v622
        %v627 = vadd.f32 %v590, %v623
        %v628 = vld [vmem:[%s6] sm:$0x1]
        %v630 = vperm.slane %v628, 0
        %v632 = vadd.f32 %v624, %v630
        %v633 = vadd.f32 %v625, %v630
        %v634 = vadd.f32 %v626, %v630
        %v635 = vadd.f32 %v627, %v630
        %vm636 = vcmp.ge.f32.partialorder %v632, 0.0
        %vm637 = vcmp.ge.f32.partialorder %v633, 0.0
        %vm638 = vcmp.ge.f32.partialorder %v634, 0.0
        %vm639 = vcmp.ge.f32.partialorder %v635, 0.0
        %v640 = vmul.f32 %v632, 0.01
        %v641 = vmul.f32 %v633, 0.01
        %v642 = vmul.f32 %v634, 0.01
        %v643 = vmul.f32 %v635, 0.01
        %v644 = vsel %vm636, %v632, %v640
        %v645 = vsel %vm637, %v633, %v641
        %v646 = vsel %vm638, %v634, %v642
        %v647 = vsel %vm639, %v635, %v643
        %v648 = vld [vmem:[%s7] sm:$0xff]
        %v649 = vld [vmem:[%s7 + $0x8] sm:$0xff]
        %v650 = vld [vmem:[%s7 + $0x10] sm:$0xff]
        %v651 = vld [vmem:[%s7 + $0x18] sm:$0xff]
        %v652 = vld [vmem:[%s7 + $0x20] sm:$0xff]
        %v653 = vld [vmem:[%s7 + $0x28] sm:$0xff]
        %v654 = vld [vmem:[%s7 + $0x30] sm:$0xff]
        %v655 = vld [vmem:[%s7 + $0x38] sm:$0xff]
        %v656 = vld [vmem:[%s7 + $0x40] sm:$0xff]
        %v657 = vld [vmem:[%s7 + $0x48] sm:$0xff]
        %v658 = vld [vmem:[%s7 + $0x50] sm:$0xff]
        %v659 = vld [vmem:[%s7 + $0x58] sm:$0xff]
        %v660 = vld [vmem:[%s7 + $0x60] sm:$0xff]
        %v661 = vld [vmem:[%s7 + $0x68] sm:$0xff]
        %v662 = vld [vmem:[%s7 + $0x70] sm:$0xff]
        %v663 = vld [vmem:[%s7 + $0x78] sm:$0xff]
        %v664 = vld [vmem:[%s8] sm:$0x1]
        %v666 = vperm.slane %v664, 0
        %668 = vmatpush.msra.mxu0 %v663
        %669 = vmatpush.msra.mxu0 %v662
        %670 = vmatpush.msra.mxu0 %v661
        %671 = vmatpush.msra.mxu0 %v660
        %672 = vmatpush.msra.mxu0 %v659
        %673 = vmatpush.msra.mxu0 %v658
        %674 = vmatpush.msra.mxu0 %v657
        %675 = vmatpush.msra.mxu0 %v656
        %676 = vmatpush.msra.mxu0 %v655
        %677 = vmatpush.msra.mxu0 %v654
        %678 = vmatpush.msra.mxu0 %v653
        %679 = vmatpush.msra.mxu0 %v652
        %680 = vmatpush.msra.mxu0 %v651
        %681 = vmatpush.msra.mxu0 %v650
        %682 = vmatpush.msra.mxu0 %v649
        %683 = vmatpush.msra.mxu0 %v648
        %684 = vmatmul.f32.gmra.mxu0 %v644
        %v685 = vpop.f32.mrf.mxu0
        %v686 = vadd.f32 %v666, %v685
        %687 = vmatmul.f32.gmra.mxu0 %v645
        %v688 = vpop.f32.mrf.mxu0
        %v689 = vadd.f32 %v666, %v688
        %690 = vmatmul.f32.gmra.mxu0 %v646
        %v691 = vpop.f32.mrf.mxu0
        %v692 = vadd.f32 %v666, %v691
        %693 = vmatmul.f32.gmra.mxu0 %v647
        %v694 = vpop.f32.mrf.mxu0
        %v695 = vadd.f32 %v666, %v694
        %696 = vdwg.mxu0
        %vm697 = vcmp.ge.f32.partialorder %v686, 0.0
        %vm698 = vcmp.ge.f32.partialorder %v689, 0.0
        %vm699 = vcmp.ge.f32.partialorder %v692, 0.0
        %vm700 = vcmp.ge.f32.partialorder %v695, 0.0
        %v701 = vmul.f32 %v686, 0.01
        %v702 = vmul.f32 %v689, 0.01
        %v703 = vmul.f32 %v692, 0.01
        %v704 = vmul.f32 %v695, 0.01
        %v705 = vsel %vm697, %v686, %v701
        %v706 = vsel %vm698, %v689, %v702
        %v707 = vsel %vm699, %v692, %v703
        %v708 = vsel %vm700, %v695, %v704
        %v709 = vld [vmem:[%s9] sm:$0xff]
        %v710 = vld [vmem:[%s9 + $0x8] sm:$0xff]
        %v711 = vld [vmem:[%s9 + $0x10] sm:$0xff]
        %v712 = vld [vmem:[%s9 + $0x18] sm:$0xff]
        %v713 = vld [vmem:[%s9 + $0x20] sm:$0xff]
        %v714 = vld [vmem:[%s9 + $0x28] sm:$0xff]
        %v715 = vld [vmem:[%s9 + $0x30] sm:$0xff]
        %v716 = vld [vmem:[%s9 + $0x38] sm:$0xff]
        %v717 = vld [vmem:[%s9 + $0x40] sm:$0xff]
        %v718 = vld [vmem:[%s9 + $0x48] sm:$0xff]
        %v719 = vld [vmem:[%s9 + $0x50] sm:$0xff]
        %v720 = vld [vmem:[%s9 + $0x58] sm:$0xff]
        %v721 = vld [vmem:[%s9 + $0x60] sm:$0xff]
        %v722 = vld [vmem:[%s9 + $0x68] sm:$0xff]
        %v723 = vld [vmem:[%s9 + $0x70] sm:$0xff]
        %v724 = vld [vmem:[%s9 + $0x78] sm:$0xff]
        %v725 = vld [vmem:[%s10] sm:$0x1]
        %v727 = vperm.slane %v725, 0
        %729 = vmatpush.msra.mxu0 %v724
        %730 = vmatpush.msra.mxu0 %v723
        %731 = vmatpush.msra.mxu0 %v722
        %732 = vmatpush.msra.mxu0 %v721
        %733 = vmatpush.msra.mxu0 %v720
        %734 = vmatpush.msra.mxu0 %v719
        %735 = vmatpush.msra.mxu0 %v718
        %736 = vmatpush.msra.mxu0 %v717
        %737 = vmatpush.msra.mxu0 %v716
        %738 = vmatpush.msra.mxu0 %v715
        %739 = vmatpush.msra.mxu0 %v714
        %740 = vmatpush.msra.mxu0 %v713
        %741 = vmatpush.msra.mxu0 %v712
        %742 = vmatpush.msra.mxu0 %v711
        %743 = vmatpush.msra.mxu0 %v710
        %744 = vmatpush.msra.mxu0 %v709
        %745 = vmatmul.f32.gmra.mxu0 %v705
        %v746 = vpop.f32.mrf.mxu0
        %v747 = vadd.f32 %v727, %v746
        %748 = vmatmul.f32.gmra.mxu0 %v706
        %v749 = vpop.f32.mrf.mxu0
        %v750 = vadd.f32 %v727, %v749
        %751 = vmatmul.f32.gmra.mxu0 %v707
        %v752 = vpop.f32.mrf.mxu0
        %v753 = vadd.f32 %v727, %v752
        %754 = vmatmul.f32.gmra.mxu0 %v708
        %v755 = vpop.f32.mrf.mxu0
        %v756 = vadd.f32 %v727, %v755
        %757 = vdwg.mxu0
        %vm758 = vcmask 261120
        %759 = vst.msk [vmem:[%s444] sm:$0xff] %vm758, %v747
        %760 = vst.msk [vmem:[%s444 + $0x8] sm:$0xff] %vm758, %v750
        %761 = vst.msk [vmem:[%s444 + $0x10] sm:$0xff] %vm758, %v753
        %762 = vst.msk [vmem:[%s444 + $0x18] sm:$0xff] %vm758, %v756
        %s763 = sand.u32 %s276, 1
        %s764 = sand.u32 %s276, 1
        %s765 = smul.addr %s764, 32
        %s766 = scalar_lea.vmem [#allocation2], %s765
        // Predicated region
        $region65: #{tpu_custom_call.1} parent=63 // pred_check
          %p767 = pneg %p286
        $region66: #{tpu_custom_call.1} parent=63 // pred_check_branch
          %769 = sbr.rel (%p767) target = $region68
        $region67: #{tpu_custom_call.1} parent=63 // pred_region
          %s770 = smul.u32 4, %s22
          %s771 = ssub.s32 13, %s770
          %p772 = scmp.lt.s32.totalorder %s771, 4
          %s773 = scalar_select %p772, %s771, 4
          %s774 = smul.u32 8, %s773
          %p775 = scmp.ne.s32.totalorder 0, %s774
          %s776 = smul.addr %s770, 8
          %s777 = scalar_lea.vmem %s11, %s776
          // Predicated region
          $region69: #{tpu_custom_call.1} parent=67 // pred_check
            %p778 = pneg %p775
          $region70: #{tpu_custom_call.1} parent=67 // pred_check_branch
            %780 = sbr.rel (%p778) target = $region72
          $region71: #{tpu_custom_call.1} parent=67 // pred_region
            // Predicated region
            $region73: #{tpu_custom_call.1} parent=71 // pred_check
              _
            $region74: #{tpu_custom_call.1} parent=71 // pred_check_branch
              %782 = sbr.rel (0) target = $region76
            $region75: #{tpu_custom_call.1} parent=71 // pred_region
              // Predicated region
              $region95: #{tpu_custom_call.1} parent=75 // pred_check
                _
              $region96: #{tpu_custom_call.1} parent=75 // pred_check_branch
                %838 = sbr.rel (0) target = $region98
              $region97: #{tpu_custom_call.1} parent=75 // pred_region
                %s839 = sshrl.u32 %s773, 2
                // While loop
                $region99: #{tpu_custom_call.1} parent=97 // loop_pre_header
                  _
                $region100: #{tpu_custom_call.1} parent=97 // loop_header
                  %s841 = sphi 0, %s843
                  %p842 = scmp.ge.s32.totalorder %s841, %s839
                  %s846 = sphi 0, %s859
                  %s847 = sphi %s766, %s862
                  %s848 = sphi %s777, %s863
                $region101: #{tpu_custom_call.1} parent=97 // loop_header_branch
                  %845 = sbr.rel (%p842) target = $region105
                $region102: #{tpu_custom_call.1} parent=97 // loop_body
                  %v849 = vld [vmem:[%s847] sm:$0xff]
                  %850 = vst [vmem:[%s848] sm:$0xff] %v849
                  %v851 = vld [vmem:[%s847 + $0x8] sm:$0xff]
                  %852 = vst [vmem:[%s848 + $0x8] sm:$0xff] %v851
                  %v853 = vld [vmem:[%s847 + $0x10] sm:$0xff]
                  %854 = vst [vmem:[%s848 + $0x10] sm:$0xff] %v853
                  %v855 = vld [vmem:[%s847 + $0x18] sm:$0xff]
                  %856 = vst [vmem:[%s848 + $0x18] sm:$0xff] %v855
                  %s857 = sadd.s32 1, %s846
                  %p858 = scmp.ge.s32.totalorder %s857, %s839
                  %s859 = scalar_select %p858, 0, %s857
                  %s860 = smul.u32 %s859, 32
                  %s861 = smul.u32 %s859, 32
                  %s862 = scalar_lea.vmem %s766, %s860 [#allocation2]
                  %s863 = scalar_lea.vmem %s777, %s861
                $region103: #{tpu_custom_call.1} parent=97 // loop_footer
                  %s843 = sadd.s32 %s841, 1
                $region104: #{tpu_custom_call.1} parent=97 // loop_footer_branch
                  %840 = sbr.rel target = $region100
                $region105: #{tpu_custom_call.1} parent=97 // loop_exit
                  _
                %s864 = sshrl.u32 %s773, 2
                %s865 = sand.u32 %s773, 3
                %s866 = smul.u32 %s864, 4
                %s867 = smul.u32 8, %s866
                %s868 = scalar_lea.vmem %s766, %s867 [#allocation2]
                %s869 = smul.u32 8, %s866
                %s870 = scalar_lea.vmem %s777, %s869
                // While loop
                $region106: #{tpu_custom_call.1} parent=97 // loop_pre_header
                  _
                $region107: #{tpu_custom_call.1} parent=97 // loop_header
                  %s872 = sphi 0, %s874
                  %p873 = scmp.ge.s32.totalorder %s872, %s865
                  %s877 = sphi 0, %s884
                  %s878 = sphi %s868, %s887
                  %s879 = sphi %s870, %s888
                $region108: #{tpu_custom_call.1} parent=97 // loop_header_branch
                  %876 = sbr.rel (%p873) target = $region112
                $region109: #{tpu_custom_call.1} parent=97 // loop_body
                  %v880 = vld [vmem:[%s878] sm:$0xff]
                  %881 = vst [vmem:[%s879] sm:$0xff] %v880
                  %s882 = sadd.s32 1, %s877
                  %p883 = scmp.ge.s32.totalorder %s882, %s865
                  %s884 = scalar_select %p883, 0, %s882
                  %s885 = smul.u32 %s884, 8
                  %s886 = smul.u32 %s884, 8
                  %s887 = scalar_lea.vmem %s868, %s885 [#allocation2]
                  %s888 = scalar_lea.vmem %s870, %s886
                $region110: #{tpu_custom_call.1} parent=97 // loop_footer
                  %s874 = sadd.s32 %s872, 1
                $region111: #{tpu_custom_call.1} parent=97 // loop_footer_branch
                  %871 = sbr.rel target = $region107
                $region112: #{tpu_custom_call.1} parent=97 // loop_exit
                  _
              $region98: #{tpu_custom_call.1} parent=75 // pred_fallthru
                _
              // Predicated region
              $region113: #{tpu_custom_call.1} parent=75 // pred_check
                _
              $region114: #{tpu_custom_call.1} parent=75 // pred_check_branch
                %890 = sbr.rel target = $region116
              $region115: #{tpu_custom_call.1} parent=75 // pred_region
                _
              $region116: #{tpu_custom_call.1} parent=75 // pred_fallthru
                _
            $region76: #{tpu_custom_call.1} parent=71 // pred_fallthru
              _
            // Predicated region
            $region77: #{tpu_custom_call.1} parent=71 // pred_check
              _
            $region78: #{tpu_custom_call.1} parent=71 // pred_check_branch
              %784 = sbr.rel target = $region80
            $region79: #{tpu_custom_call.1} parent=71 // pred_region
              %s786 = ssub.s32 256, 1
              %s787 = sshrl.u32 %s773, 2
              // While loop
              $region81: #{tpu_custom_call.1} parent=79 // loop_pre_header
                _
              $region82: #{tpu_custom_call.1} parent=79 // loop_header
                %s789 = sphi 0, %s791
                %p790 = scmp.ge.s32.totalorder %s789, %s787
                %s794 = sphi 0, %s807
                %s795 = sphi %s766, %s810
                %s796 = sphi %s777, %s811
              $region83: #{tpu_custom_call.1} parent=79 // loop_header_branch
                %793 = sbr.rel (%p790) target = $region87
              $region84: #{tpu_custom_call.1} parent=79 // loop_body
                %v797 = vld [vmem:[%s795] sm:%s786]
                %798 = vst [vmem:[%s796] sm:%s786] %v797
                %v799 = vld [vmem:[%s795 + $0x8] sm:%s786]
                %800 = vst [vmem:[%s796 + $0x8] sm:%s786] %v799
                %v801 = vld [vmem:[%s795 + $0x10] sm:%s786]
                %802 = vst [vmem:[%s796 + $0x10] sm:%s786] %v801
                %v803 = vld [vmem:[%s795 + $0x18] sm:%s786]
                %804 = vst [vmem:[%s796 + $0x18] sm:%s786] %v803
                %s805 = sadd.s32 1, %s794
                %p806 = scmp.ge.s32.totalorder %s805, %s787
                %s807 = scalar_select %p806, 0, %s805
                %s808 = smul.u32 %s807, 32
                %s809 = smul.u32 %s807, 32
                %s810 = scalar_lea.vmem %s766, %s808 [#allocation2]
                %s811 = scalar_lea.vmem %s777, %s809
              $region85: #{tpu_custom_call.1} parent=79 // loop_footer
                %s791 = sadd.s32 %s789, 1
              $region86: #{tpu_custom_call.1} parent=79 // loop_footer_branch
                %788 = sbr.rel target = $region82
              $region87: #{tpu_custom_call.1} parent=79 // loop_exit
                _
              %s812 = sshrl.u32 %s773, 2
              %s813 = sand.u32 %s773, 3
              %s814 = smul.u32 %s812, 4
              %s815 = smul.u32 8, %s814
              %s816 = scalar_lea.vmem %s766, %s815 [#allocation2]
              %s817 = smul.u32 8, %s814
              %s818 = scalar_lea.vmem %s777, %s817
              // While loop
              $region88: #{tpu_custom_call.1} parent=79 // loop_pre_header
                _
              $region89: #{tpu_custom_call.1} parent=79 // loop_header
                %s820 = sphi 0, %s822
                %p821 = scmp.ge.s32.totalorder %s820, %s813
                %s825 = sphi 0, %s832
                %s826 = sphi %s816, %s835
                %s827 = sphi %s818, %s836
              $region90: #{tpu_custom_call.1} parent=79 // loop_header_branch
                %824 = sbr.rel (%p821) target = $region94
              $region91: #{tpu_custom_call.1} parent=79 // loop_body
                %v828 = vld [vmem:[%s826] sm:%s786]
                %829 = vst [vmem:[%s827] sm:%s786] %v828
                %s830 = sadd.s32 1, %s825
                %p831 = scmp.ge.s32.totalorder %s830, %s813
                %s832 = scalar_select %p831, 0, %s830
                %s833 = smul.u32 %s832, 8
                %s834 = smul.u32 %s832, 8
                %s835 = scalar_lea.vmem %s816, %s833 [#allocation2]
                %s836 = scalar_lea.vmem %s818, %s834
              $region92: #{tpu_custom_call.1} parent=79 // loop_footer
                %s822 = sadd.s32 %s820, 1
              $region93: #{tpu_custom_call.1} parent=79 // loop_footer_branch
                %819 = sbr.rel target = $region89
              $region94: #{tpu_custom_call.1} parent=79 // loop_exit
                _
            $region80: #{tpu_custom_call.1} parent=71 // pred_fallthru
              _
          $region72: #{tpu_custom_call.1} parent=67 // pred_fallthru
            _
          %891 = vnop
        $region68: #{tpu_custom_call.1} parent=63 // pred_fallthru
          _
      $region64: #{tpu_custom_call.1} parent=5 // pred_fallthru
        _
      %p892 = scmp.le.s32.totalorder 2, %s17
      // Predicated region
      $region117: #{tpu_custom_call.1} parent=5 // pred_check
        %p893 = pneg %p892
      $region118: #{tpu_custom_call.1} parent=5 // pred_check_branch
        %895 = sbr.rel (%p893) target = $region120
      $region119: #{tpu_custom_call.1} parent=5 // pred_region
        %s896 = ssub.s32 %s17, 2
        // Predicated region
        $region121: #{tpu_custom_call.1} parent=119 // pred_check
          %p897 = pneg %p292
        $region122: #{tpu_custom_call.1} parent=119 // pred_check_branch
          %899 = sbr.rel (%p897) target = $region124
        $region123: #{tpu_custom_call.1} parent=119 // pred_region
          %s900 = sand.u32 %s277, 1
          %s901 = sand.u32 %s277, 1
          %s902 = smul.addr %s901, 32
          %s903 = scalar_lea.vmem [#allocation2], %s902
        $region124: #{tpu_custom_call.1} parent=119 // pred_fallthru
          _
      $region120: #{tpu_custom_call.1} parent=5 // pred_fallthru
        _
    $region6: #{tpu_custom_call.1} parent=1 // loop_footer
      %s21 = sadd.s32 1, %s17
    $region7: #{tpu_custom_call.1} parent=1 // loop_footer_branch
      %16 = sbr.rel target = $region3
    $region8: #{tpu_custom_call.1} parent=1 // loop_exit
      _

</llo_original>
